<compile_context>
chip_gen: v7x
topology: tpu7x:2x2x1
jax: 0.10.0
libtpu: 0.0.40
codegen_flags: <defaults>
</compile_context>

<pallas_src>
import math

import jax
import jax.numpy as jnp
from jax import lax
from jax.experimental import pallas as pl
from jax.experimental.pallas import tpu as pltpu

_INV_SQRT2 = 1.0 / math.sqrt(2.0)


def _gelu_exact(x):
    # torch.nn.GELU(approximate='none'): 0.5 * x * (1 + erf(x / sqrt(2)))
    return 0.5 * x * (1.0 + lax.erf(x * _INV_SQRT2))


def _round_up(n, m):
    return (n + m - 1) // m * m


def autoencoder_kernel(
    x_ref,            # [TB, IN_P]
    we_ref, be_ref,   # encoder            [IN_P, H_P], [1, H_P]
    wb_ref, bb_ref,   # fused bottlenecks  [H_P,  H_P], [1, H_P]
    wd_ref, bd_ref,   # decoder            [H_P, IN_P], [1, IN_P]
    out_ref,          # [TB, IN_P]  reconstruction
    feat_ref,         # [TB, H_P]   feature = gelu(z)
    z_ref,            # [TB, H_P]   pre-GELU bottleneck acts (l1 = z[:, L:H])
):
    x = x_ref[...]

    # hidden = gelu(encoder(x))  -- f32 accumulate on the MXU, f32 GELU on VPU
    hidden = _gelu_exact(
        jnp.dot(x, we_ref[...], preferred_element_type=jnp.float32) + be_ref[...]
    )

    # Fused label_bottleneck + l1_bottleneck: one lane-dense [H_P, H_P] matmul.
    z = (
        jnp.dot(hidden.astype(wb_ref.dtype), wb_ref[...],
                preferred_element_type=jnp.float32)
        + bb_ref[...]
    )
    feature = _gelu_exact(z)

    # output = decoder(feature)
    out = (
        jnp.dot(feature.astype(wd_ref.dtype), wd_ref[...],
                preferred_element_type=jnp.float32)
        + bd_ref[...]
    )

    out_ref[...] = out.astype(out_ref.dtype)
    feat_ref[...] = feature.astype(feat_ref.dtype)
    z_ref[...] = z.astype(z_ref.dtype)


def autoencoder_forward(x, params, *, use_bf16=False, tb=None):
    """x: [B, input_size] float32. params: dict of pre-transposed [in, out] weights."""
    B, input_size = x.shape
    we, be = params["we"], params["be"]   # [input_size, H], [1, H]
    wl, bl = params["wl"], params["bl"]   # [H, L],           [1, L]
    w1, b1 = params["w1"], params["b1"]   # [H, H-L],         [1, H-L]
    wd, bd = params["wd"], params["bd"]   # [H, input_size],  [1, input_size]
    H = we.shape[1]
    L = wl.shape[1]

    # ---- fuse the two bottleneck linears into one [H, H] layer
    wb = jnp.concatenate([wl, w1], axis=1)   # [H, H]
    bb = jnp.concatenate([bl, b1], axis=1)   # [1, H]

    # ---- pad every feature dim to a multiple of 128 lanes (zero padding is exact)
    IN_P = _round_up(input_size, 128)
    H_P = _round_up(H, 128)

    def pad2(a, r, c):
        return jnp.pad(a, ((0, r - a.shape[0]), (0, c - a.shape[1])))

    mat_dtype = jnp.bfloat16 if use_bf16 else jnp.float32

    we_p = pad2(we, IN_P, H_P).astype(mat_dtype)
    be_p = pad2(be, 1, H_P)                       # biases stay f32
    wb_p = pad2(wb, H_P, H_P).astype(mat_dtype)
    bb_p = pad2(bb, 1, H_P)
    wd_p = pad2(wd, H_P, IN_P).astype(mat_dtype)
    bd_p = pad2(bd, 1, IN_P)

    # ---- batch tiling: TB rows per grid step (double-buffered x/out tiles)
    if tb is None:
        tb = 128 if B >= 128 else _round_up(B, 8)
    TB = min(_round_up(tb, 8), 512)
    B_P = _round_up(B, TB)
    n_blocks = B_P // TB
    x_p = pad2(x, B_P, IN_P).astype(mat_dtype)

    # ---- explicit VMEM budget (weights resident, x/out double-buffered),
    #      kept well under v7x's 64 MiB physical VMEM.
    itemsize = jnp.dtype(mat_dtype).itemsize
    w_bytes = (we_p.size + wb_p.size + wd_p.size) * itemsize \
        + (be_p.size + bb_p.size + bd_p.size) * 4
    x_tile_bytes = TB * IN_P * itemsize
    out_tile_bytes = TB * (IN_P + 2 * H_P) * 4
    vmem_bytes = 2 * (w_bytes + x_tile_bytes + out_tile_bytes) + (4 << 20)
    vmem_bytes = int(min(max(vmem_bytes, 8 << 20), 48 << 20))

    # ---- cost estimate for the XLA scheduler
    flops = 2 * B_P * (IN_P * H_P + H_P * H_P + H_P * IN_P)
    bytes_accessed = x_p.size * itemsize + w_bytes + B_P * (IN_P + 2 * H_P) * 4
    cost = pl.CostEstimate(
        flops=flops, transcendentals=0, bytes_accessed=int(bytes_accessed))

    const = lambda shape: pl.BlockSpec(shape, lambda i: (0, 0))

    out_p, feat_p, z_p = pl.pallas_call(
        autoencoder_kernel,
        out_shape=(
            jax.ShapeDtypeStruct((B_P, IN_P), jnp.float32),
            jax.ShapeDtypeStruct((B_P, H_P), jnp.float32),
            jax.ShapeDtypeStruct((B_P, H_P), jnp.float32),
        ),
        grid=(n_blocks,),
        in_specs=[
            pl.BlockSpec((TB, IN_P), lambda i: (i, 0)),   # x tile, streamed
            const(we_p.shape), const(be_p.shape),          # weights resident
            const(wb_p.shape), const(bb_p.shape),
            const(wd_p.shape), const(bd_p.shape),
        ],
        out_specs=[
            pl.BlockSpec((TB, IN_P), lambda i: (i, 0)),
            pl.BlockSpec((TB, H_P), lambda i: (i, 0)),
            pl.BlockSpec((TB, H_P), lambda i: (i, 0)),
        ],
        compiler_params=pltpu.CompilerParams(
            dimension_semantics=("parallel",),   # v7x: shard batch across 2 TCs
            vmem_limit_bytes=vmem_bytes,
        ),
        cost_estimate=cost,
    )(x_p, we_p, be_p, wb_p, bb_p, wd_p, bd_p)

    # ---- strip padding / recover the three module outputs
    output = out_p[:B, :input_size]
    feature = feat_p[:B, :H]
    l1 = z_p[:B, L:H]
    return output, feature, l1


def init_params(key, input_size, hidden_size, L):
    """Deterministic synthetic parameters (PyTorch Linear shapes, pre-transposed)."""
    ks = jax.random.split(key, 8)

    def linear(kw, kb, fan_in, fan_out):
        bound = 1.0 / math.sqrt(fan_in)
        # store as [in, out] so the kernel does x @ W
        w = jax.random.uniform(kw, (fan_in, fan_out), jnp.float32, -bound, bound)
        b = jax.random.uniform(kb, (1, fan_out), jnp.float32, -bound, bound)
        return w, b

    we, be = linear(ks[0], ks[1], input_size, hidden_size)
    wl, bl = linear(ks[2], ks[3], hidden_size, L)
    w1, b1 = linear(ks[4], ks[5], hidden_size, hidden_size - L)
    wd, bd = linear(ks[6], ks[7], hidden_size, input_size)
    return dict(we=we, be=be, wl=wl, bl=bl, w1=w1, b1=b1, wd=wd, bd=bd)


def reference_forward(x, p):
    """Pure-JAX reference matching the PyTorch forward."""
    g = lambda v: 0.5 * v * (1.0 + lax.erf(v / math.sqrt(2.0)))
    hidden = g(x @ p["we"] + p["be"])
    bottleneck = g(hidden @ p["wl"] + p["bl"])
    l1 = hidden @ p["w1"] + p["b1"]
    feature = jnp.concatenate([bottleneck, g(l1)], axis=-1)
    output = feature @ p["wd"] + p["bd"]
    return output, feature, l1


if __name__ == "__main__":
    input_size, hidden_size, L = 32, 32, 8
    batch = 8

    key = jax.random.PRNGKey(0)
    kx, kp = jax.random.split(key)
    x = jax.random.normal(kx, (batch, input_size), jnp.float32)
    params = init_params(kp, input_size, hidden_size, L)

    ref_out, ref_feat, ref_l1 = reference_forward(x, params)

    # f32 path (bit-parity target with the PyTorch module)
    out, feat, l1 = jax.block_until_ready(autoencoder_forward(x, params))
    assert out.shape == (batch, input_size)
    assert feat.shape == (batch, hidden_size)
    assert l1.shape == (batch, hidden_size - L)
    assert jnp.allclose(out, ref_out, atol=2e-5, rtol=2e-5)
    assert jnp.allclose(feat, ref_feat, atol=2e-5, rtol=2e-5)
    assert jnp.allclose(l1, ref_l1, atol=2e-5, rtol=2e-5)

    # bf16 matmul-input / f32-accumulate path (v6e / v7x MXU throughput)
    out_bf, feat_bf, l1_bf = jax.block_until_ready(
        autoencoder_forward(x, params, use_bf16=True))
    assert jnp.allclose(out_bf, ref_out, atol=5e-2, rtol=5e-2)
    assert jnp.allclose(feat_bf, ref_feat, atol=5e-2, rtol=5e-2)
    assert jnp.allclose(l1_bf, ref_l1, atol=5e-2, rtol=5e-2)

    print("KERNEL_OK")
</pallas_src>

<mosaic_0001>
module attributes {stable_mosaic.version = 11 : i64} {
  func.func @autoencoder_kernel(%arg0: i32, %arg1: memref<8x128xf32, #tpu.memory_space<vmem>>, %arg2: memref<128x128xf32, #tpu.memory_space<vmem>>, %arg3: memref<1x128xf32, #tpu.memory_space<vmem>>, %arg4: memref<128x128xf32, #tpu.memory_space<vmem>>, %arg5: memref<1x128xf32, #tpu.memory_space<vmem>>, %arg6: memref<128x128xf32, #tpu.memory_space<vmem>>, %arg7: memref<1x128xf32, #tpu.memory_space<vmem>>, %arg8: memref<8x128xf32, #tpu.memory_space<vmem>>, %arg9: memref<8x128xf32, #tpu.memory_space<vmem>>, %arg10: memref<8x128xf32, #tpu.memory_space<vmem>>) attributes {dimension_semantics = [#tpu.dimension_semantics<parallel>], iteration_bounds = array<i64: 1>, scalar_prefetch = 0 : i64, scratch_operands = 0 : i64, tpu.core_type = #tpu.core_type<tc>, window_params = [{transform_indices = @transform_0, window_bounds = array<i64: 8, 128>}, {pipeline_mode = #tpu.pipeline_mode<synchronous>, transform_indices = @transform_1, window_bounds = array<i64: 128, 128>}, {pipeline_mode = #tpu.pipeline_mode<synchronous>, transform_indices = @transform_2, window_bounds = array<i64: 1, 128>}, {pipeline_mode = #tpu.pipeline_mode<synchronous>, transform_indices = @transform_3, window_bounds = array<i64: 128, 128>}, {pipeline_mode = #tpu.pipeline_mode<synchronous>, transform_indices = @transform_4, window_bounds = array<i64: 1, 128>}, {pipeline_mode = #tpu.pipeline_mode<synchronous>, transform_indices = @transform_5, window_bounds = array<i64: 128, 128>}, {pipeline_mode = #tpu.pipeline_mode<synchronous>, transform_indices = @transform_6, window_bounds = array<i64: 1, 128>}, {transform_indices = @transform_7, window_bounds = array<i64: 8, 128>}, {transform_indices = @transform_8, window_bounds = array<i64: 8, 128>}, {transform_indices = @transform_9, window_bounds = array<i64: 8, 128>}]} {
    %c0 = arith.constant 0 : index
    %c0_0 = arith.constant 0 : index
    %0 = vector.load %arg1[%c0, %c0_0] : memref<8x128xf32, #tpu.memory_space<vmem>>, vector<8x128xf32>
    %c0_1 = arith.constant 0 : index
    %c0_2 = arith.constant 0 : index
    %1 = vector.load %arg2[%c0_1, %c0_2] : memref<128x128xf32, #tpu.memory_space<vmem>>, vector<128x128xf32>
    %cst = arith.constant dense<0.000000e+00> : vector<8x128xf32>
    %2 = tpu.matmul %0, %1, %cst {dimension_numbers = #tpu.dot_dimension_numbers<[1], [0], [0], [1], [0, 0, 1, 1], [], []>} : vector<8x128xf32>, vector<128x128xf32>, vector<8x128xf32> -> vector<8x128xf32>
    %c0_3 = arith.constant 0 : index
    %c0_4 = arith.constant 0 : index
    %3 = vector.load %arg3[%c0_3, %c0_4] : memref<1x128xf32, #tpu.memory_space<vmem>>, vector<1x128xf32>
    %4 = vector.broadcast %3 : vector<1x128xf32> to vector<8x128xf32>
    %5 = arith.addf %2, %4 : vector<8x128xf32>
    %cst_5 = arith.constant 5.000000e-01 : f32
    %6 = vector.broadcast %cst_5 : f32 to vector<8x128xf32>
    %7 = arith.mulf %6, %5 : vector<8x128xf32>
    %cst_6 = arith.constant 0.707106769 : f32
    %8 = vector.broadcast %cst_6 : f32 to vector<8x128xf32>
    %9 = arith.mulf %5, %8 : vector<8x128xf32>
    %10 = math.erf %9 : vector<8x128xf32>
    %cst_7 = arith.constant 1.000000e+00 : f32
    %11 = vector.broadcast %cst_7 : f32 to vector<8x128xf32>
    %12 = arith.addf %11, %10 : vector<8x128xf32>
    %13 = arith.mulf %7, %12 : vector<8x128xf32>
    %c0_8 = arith.constant 0 : index
    %c0_9 = arith.constant 0 : index
    %14 = vector.load %arg4[%c0_8, %c0_9] : memref<128x128xf32, #tpu.memory_space<vmem>>, vector<128x128xf32>
    %cst_10 = arith.constant dense<0.000000e+00> : vector<8x128xf32>
    %15 = tpu.matmul %13, %14, %cst_10 {dimension_numbers = #tpu.dot_dimension_numbers<[1], [0], [0], [1], [0, 0, 1, 1], [], []>} : vector<8x128xf32>, vector<128x128xf32>, vector<8x128xf32> -> vector<8x128xf32>
    %c0_11 = arith.constant 0 : index
    %c0_12 = arith.constant 0 : index
    %16 = vector.load %arg5[%c0_11, %c0_12] : memref<1x128xf32, #tpu.memory_space<vmem>>, vector<1x128xf32>
    %17 = vector.broadcast %16 : vector<1x128xf32> to vector<8x128xf32>
    %18 = arith.addf %15, %17 : vector<8x128xf32>
    %cst_13 = arith.constant 5.000000e-01 : f32
    %19 = vector.broadcast %cst_13 : f32 to vector<8x128xf32>
    %20 = arith.mulf %19, %18 : vector<8x128xf32>
    %cst_14 = arith.constant 0.707106769 : f32
    %21 = vector.broadcast %cst_14 : f32 to vector<8x128xf32>
    %22 = arith.mulf %18, %21 : vector<8x128xf32>
    %23 = math.erf %22 : vector<8x128xf32>
    %cst_15 = arith.constant 1.000000e+00 : f32
    %24 = vector.broadcast %cst_15 : f32 to vector<8x128xf32>
    %25 = arith.addf %24, %23 : vector<8x128xf32>
    %26 = arith.mulf %20, %25 : vector<8x128xf32>
    %c0_16 = arith.constant 0 : index
    %c0_17 = arith.constant 0 : index
    %27 = vector.load %arg6[%c0_16, %c0_17] : memref<128x128xf32, #tpu.memory_space<vmem>>, vector<128x128xf32>
    %cst_18 = arith.constant dense<0.000000e+00> : vector<8x128xf32>
    %28 = tpu.matmul %26, %27, %cst_18 {dimension_numbers = #tpu.dot_dimension_numbers<[1], [0], [0], [1], [0, 0, 1, 1], [], []>} : vector<8x128xf32>, vector<128x128xf32>, vector<8x128xf32> -> vector<8x128xf32>
    %c0_19 = arith.constant 0 : index
    %c0_20 = arith.constant 0 : index
    %29 = vector.load %arg7[%c0_19, %c0_20] : memref<1x128xf32, #tpu.memory_space<vmem>>, vector<1x128xf32>
    %30 = vector.broadcast %29 : vector<1x128xf32> to vector<8x128xf32>
    %31 = arith.addf %28, %30 : vector<8x128xf32>
    %c0_21 = arith.constant 0 : index
    %c0_22 = arith.constant 0 : index
    %32 = vector.load %arg8[%c0_21, %c0_22] : memref<8x128xf32, #tpu.memory_space<vmem>>, vector<8x128xf32>
    tpu.vector_store %arg8[%c0_21, %c0_22], %31 {strides = array<i32>} : memref<8x128xf32, #tpu.memory_space<vmem>>, vector<8x128xf32>,
    %c0_23 = arith.constant 0 : index
    %c0_24 = arith.constant 0 : index
    %33 = vector.load %arg9[%c0_23, %c0_24] : memref<8x128xf32, #tpu.memory_space<vmem>>, vector<8x128xf32>
    tpu.vector_store %arg9[%c0_23, %c0_24], %26 {strides = array<i32>} : memref<8x128xf32, #tpu.memory_space<vmem>>, vector<8x128xf32>,
    %c0_25 = arith.constant 0 : index
    %c0_26 = arith.constant 0 : index
    %34 = vector.load %arg10[%c0_25, %c0_26] : memref<8x128xf32, #tpu.memory_space<vmem>>, vector<8x128xf32>
    tpu.vector_store %arg10[%c0_25, %c0_26], %18 {strides = array<i32>} : memref<8x128xf32, #tpu.memory_space<vmem>>, vector<8x128xf32>,
    return
  }
  func.func @transform_0(%arg0: i32) -> (i32, i32) {
    %c0_i32 = arith.constant 0 : i32
    %c0_i32_0 = arith.constant 0 : i32
    return %arg0, %c0_i32 : i32, i32
  }
  func.func @transform_1(%arg0: i32) -> (i32, i32) {
    %c0_i32 = arith.constant 0 : i32
    %c0_i32_0 = arith.constant 0 : i32
    %c0_i32_1 = arith.constant 0 : i32
    return %c0_i32, %c0_i32_0 : i32, i32
  }
  func.func @transform_2(%arg0: i32) -> (i32, i32) {
    %c0_i32 = arith.constant 0 : i32
    %c0_i32_0 = arith.constant 0 : i32
    %c0_i32_1 = arith.constant 0 : i32
    return %c0_i32, %c0_i32_0 : i32, i32
  }
  func.func @transform_3(%arg0: i32) -> (i32, i32) {
    %c0_i32 = arith.constant 0 : i32
    %c0_i32_0 = arith.constant 0 : i32
    %c0_i32_1 = arith.constant 0 : i32
    return %c0_i32, %c0_i32_0 : i32, i32
  }
  func.func @transform_4(%arg0: i32) -> (i32, i32) {
    %c0_i32 = arith.constant 0 : i32
    %c0_i32_0 = arith.constant 0 : i32
    %c0_i32_1 = arith.constant 0 : i32
    return %c0_i32, %c0_i32_0 : i32, i32
  }
  func.func @transform_5(%arg0: i32) -> (i32, i32) {
    %c0_i32 = arith.constant 0 : i32
    %c0_i32_0 = arith.constant 0 : i32
    %c0_i32_1 = arith.constant 0 : i32
    return %c0_i32, %c0_i32_0 : i32, i32
  }
  func.func @transform_6(%arg0: i32) -> (i32, i32) {
    %c0_i32 = arith.constant 0 : i32
    %c0_i32_0 = arith.constant 0 : i32
    %c0_i32_1 = arith.constant 0 : i32
    return %c0_i32, %c0_i32_0 : i32, i32
  }
  func.func @transform_7(%arg0: i32) -> (i32, i32) {
    %c0_i32 = arith.constant 0 : i32
    %c0_i32_0 = arith.constant 0 : i32
    return %arg0, %c0_i32 : i32, i32
  }
  func.func @transform_8(%arg0: i32) -> (i32, i32) {
    %c0_i32 = arith.constant 0 : i32
    %c0_i32_0 = arith.constant 0 : i32
    return %arg0, %c0_i32 : i32, i32
  }
  func.func @transform_9(%arg0: i32) -> (i32, i32) {
    %c0_i32 = arith.constant 0 : i32
    %c0_i32_0 = arith.constant 0 : i32
    return %arg0, %c0_i32 : i32, i32
  }
}

</mosaic_0001>

<llo_original>
// kernel: tpu_custom_call.1
$region0: #{tpu_custom_call.1}
  #allocation0 [shape = 'u32[]', space=smem, size = 0x4, offset = 0x4, fixed_abs, tag = 'smem constant byte address 0x4 - core index']
  #allocation1 [shape = 'u32[144,128]{1,0:T(1,128)}', space=vmem, size = 0x12000, scoped, tag = 'internal scratch']
  %s0 = inlined_call_operand.hbm [shape: f32[8,128], index: 0, kind: input, shape index: {}]
  %s1 = inlined_call_operand.hbm [shape: f32[128,128], index: 1, kind: input, shape index: {}]
  %s2 = inlined_call_operand.vmem [shape: f32[1,128], index: 2, kind: input, shape index: {}]
  %s3 = inlined_call_operand.hbm [shape: f32[128,128], index: 3, kind: input, shape index: {}]
  %s4 = inlined_call_operand.vmem [shape: f32[1,128], index: 4, kind: input, shape index: {}]
  %s5 = inlined_call_operand.hbm [shape: f32[128,128], index: 5, kind: input, shape index: {}]
  %s6 = inlined_call_operand.vmem [shape: f32[1,128], index: 6, kind: input, shape index: {}]
  %s7 = inlined_call_operand.hbm [shape: f32[8,128], index: 7, kind: output, shape index: {0}]
  %s8 = inlined_call_operand.hbm [shape: f32[8,128], index: 8, kind: output, shape index: {1}]
  %s9 = inlined_call_operand.hbm [shape: f32[8,128], index: 9, kind: output, shape index: {2}]
  %10 = xla_tuple %s7, %s8, %s9
  %s11 = sld [smem:[#allocation0]]
  $region70: #{tpu_custom_call.1} parent=0
    _
  %s13 = ssub.s32 1, %s11
  %s14 = scalar_select 0, %s13, %s11
  $region1: #{tpu_custom_call.1} parent=0
    #allocation2 [shape = 'u8[4096]{0}', space=vmem, size = 0x1000, scoped, tag = 'input window, operand 0, single buffered']
    #allocation3 [shape = 's32[1]{0}', space=sflag, size = 0x4, scoped, tag = 'scoped memory for tpu_custom_call.1']
    #allocation4 [shape = 's32[1]{0}', space=sflag, size = 0x4, scoped, tag = 'scoped memory for tpu_custom_call.1']
    #allocation5 [shape = 'u8[65536]{0}', space=vmem, size = 0x10000, scoped, tag = 'input window, operand 1, single buffered']
    #allocation6 [shape = 's32[1]{0}', space=sflag, size = 0x4, scoped, tag = 'scoped memory for tpu_custom_call.1']
    #allocation7 [shape = 'u8[65536]{0}', space=vmem, size = 0x10000, scoped, tag = 'input window, operand 3, single buffered']
    #allocation8 [shape = 'u8[65536]{0}', space=vmem, size = 0x10000, scoped, tag = 'input window, operand 5, single buffered']
    #allocation9 [shape = 's32[1]{0}', space=sflag, size = 0x4, scoped, tag = 'scoped memory for tpu_custom_call.1']
    #allocation10 [shape = 'u8[4096]{0}', space=vmem, size = 0x1000, scoped, tag = 'output window, operand 0, single buffered']
    #allocation11 [shape = 'u8[4096]{0}', space=vmem, size = 0x1000, scoped, tag = 'output window, operand 1, single buffered']
    #allocation12 [shape = 's32[1]{0}', space=sflag, size = 0x4, scoped, tag = 'scoped memory for tpu_custom_call.1']
    #allocation13 [shape = 'u8[4096]{0}', space=vmem, size = 0x1000, scoped, tag = 'output window, operand 2, single buffered']
    %15 = vsyncpa [#allocation3], 0
    %16 = vsyncpa [#allocation6], 0
    %17 = vsyncpa [#allocation9], 0
    %18 = vsyncpa [#allocation4], 0
    %19 = vsyncpa [#allocation12], 0
    // Predicated region
    $region2: #{tpu_custom_call.1} parent=1 // pred_check
      _
    $region3: #{tpu_custom_call.1} parent=1 // pred_check_branch
      %21 = sbr.rel (0) target = $region5
    $region4: #{tpu_custom_call.1} parent=1 // pred_region
      %s23 = ssub.s32 128, 128
      %24 = vsyncadd [#allocation3], %s23
      %s26 = sshll.u32 [#allocation2], 4
      %s27 = int_to_ptr.vmem [resolvable:$true] %s26
      %29 = dma.hbm_to_vmem [thread:$0]  %s0, 128, %s27, [#allocation3]
    $region5: #{tpu_custom_call.1} parent=1 // pred_fallthru
      _
    // Predicated region
    $region6: #{tpu_custom_call.1} parent=1 // pred_check
      _
    $region7: #{tpu_custom_call.1} parent=1 // pred_check_branch
      %31 = sbr.rel (0) target = $region9
    $region8: #{tpu_custom_call.1} parent=1 // pred_region
      %s33 = ssub.s32 2048, 2048
      %34 = vsyncadd [#allocation6], %s33
      %s35 = sshll.u32 [#allocation5], 4
      %s36 = int_to_ptr.vmem [resolvable:$true] %s35
      %41 = dma.hbm_to_vmem [thread:$0]  %s1, 2048, %s36, [#allocation6], 128, 128, 8
    $region9: #{tpu_custom_call.1} parent=1 // pred_fallthru
      _
    // Predicated region
    $region10: #{tpu_custom_call.1} parent=1 // pred_check
      _
    $region11: #{tpu_custom_call.1} parent=1 // pred_check_branch
      %43 = sbr.rel (0) target = $region13
    $region12: #{tpu_custom_call.1} parent=1 // pred_region
      _
    $region13: #{tpu_custom_call.1} parent=1 // pred_fallthru
      _
    // Predicated region
    $region14: #{tpu_custom_call.1} parent=1 // pred_check
      _
    $region15: #{tpu_custom_call.1} parent=1 // pred_check_branch
      %45 = sbr.rel (0) target = $region17
    $region16: #{tpu_custom_call.1} parent=1 // pred_region
      %s47 = ssub.s32 2048, 2048
      %48 = vsyncadd [#allocation6], %s47
      %s49 = sshll.u32 [#allocation7], 4
      %s50 = int_to_ptr.vmem [resolvable:$true] %s49
      %55 = dma.hbm_to_vmem [thread:$0]  %s3, 2048, %s50, [#allocation6], 128, 128, 8
    $region17: #{tpu_custom_call.1} parent=1 // pred_fallthru
      _
    // Predicated region
    $region18: #{tpu_custom_call.1} parent=1 // pred_check
      _
    $region19: #{tpu_custom_call.1} parent=1 // pred_check_branch
      %57 = sbr.rel (0) target = $region21
    $region20: #{tpu_custom_call.1} parent=1 // pred_region
      _
    $region21: #{tpu_custom_call.1} parent=1 // pred_fallthru
      _
    // Predicated region
    $region22: #{tpu_custom_call.1} parent=1 // pred_check
      _
    $region23: #{tpu_custom_call.1} parent=1 // pred_check_branch
      %59 = sbr.rel (0) target = $region25
    $region24: #{tpu_custom_call.1} parent=1 // pred_region
      %s61 = ssub.s32 2048, 2048
      %62 = vsyncadd [#allocation9], %s61
      %s63 = sshll.u32 [#allocation8], 4
      %s64 = int_to_ptr.vmem [resolvable:$true] %s63
      %69 = dma.hbm_to_vmem [thread:$0]  %s5, 2048, %s64, [#allocation9], 128, 128, 8
    $region25: #{tpu_custom_call.1} parent=1 // pred_fallthru
      _
    // Predicated region
    $region26: #{tpu_custom_call.1} parent=1 // pred_check
      _
    $region27: #{tpu_custom_call.1} parent=1 // pred_check_branch
      %71 = sbr.rel (0) target = $region29
    $region28: #{tpu_custom_call.1} parent=1 // pred_region
      _
    $region29: #{tpu_custom_call.1} parent=1 // pred_fallthru
      _
    // Predicated region
    $region30: #{tpu_custom_call.1} parent=1 // pred_check
      _
    $region31: #{tpu_custom_call.1} parent=1 // pred_check_branch
      %73 = sbr.rel (0) target = $region33
    $region32: #{tpu_custom_call.1} parent=1 // pred_region
      %74 = dma.done [#allocation3], 128
    $region33: #{tpu_custom_call.1} parent=1 // pred_fallthru
      _
    // Predicated region
    $region34: #{tpu_custom_call.1} parent=1 // pred_check
      _
    $region35: #{tpu_custom_call.1} parent=1 // pred_check_branch
      %76 = sbr.rel (0) target = $region37
    $region36: #{tpu_custom_call.1} parent=1 // pred_region
      %77 = dma.done [#allocation6], 2048
    $region37: #{tpu_custom_call.1} parent=1 // pred_fallthru
      _
    // Predicated region
    $region38: #{tpu_custom_call.1} parent=1 // pred_check
      _
    $region39: #{tpu_custom_call.1} parent=1 // pred_check_branch
      %79 = sbr.rel (0) target = $region41
    $region40: #{tpu_custom_call.1} parent=1 // pred_region
      %80 = dma.done [#allocation6], 2048
    $region41: #{tpu_custom_call.1} parent=1 // pred_fallthru
      _
    // Predicated region
    $region42: #{tpu_custom_call.1} parent=1 // pred_check
      _
    $region43: #{tpu_custom_call.1} parent=1 // pred_check_branch
      %82 = sbr.rel (0) target = $region45
    $region44: #{tpu_custom_call.1} parent=1 // pred_region
      %83 = dma.done [#allocation9], 2048
    $region45: #{tpu_custom_call.1} parent=1 // pred_fallthru
      _
    %v84 = vld [vmem:[#allocation2] sm:$0xff]
    %v85 = vld [vmem:[#allocation5] sm:$0xff]
    %v86 = vld [vmem:[#allocation5 + $0x8] sm:$0xff]
    %v87 = vld [vmem:[#allocation5 + $0x10] sm:$0xff]
    %v88 = vld [vmem:[#allocation5 + $0x18] sm:$0xff]
    %v89 = vld [vmem:[#allocation5 + $0x20] sm:$0xff]
    %v90 = vld [vmem:[#allocation5 + $0x28] sm:$0xff]
    %v91 = vld [vmem:[#allocation5 + $0x30] sm:$0xff]
    %v92 = vld [vmem:[#allocation5 + $0x38] sm:$0xff]
    %v93 = vld [vmem:[#allocation5 + $0x40] sm:$0xff]
    %v94 = vld [vmem:[#allocation5 + $0x48] sm:$0xff]
    %v95 = vld [vmem:[#allocation5 + $0x50] sm:$0xff]
    %v96 = vld [vmem:[#allocation5 + $0x58] sm:$0xff]
    %v97 = vld [vmem:[#allocation5 + $0x60] sm:$0xff]
    %v98 = vld [vmem:[#allocation5 + $0x68] sm:$0xff]
    %v99 = vld [vmem:[#allocation5 + $0x70] sm:$0xff]
    %v100 = vld [vmem:[#allocation5 + $0x78] sm:$0xff]
    %v101 = vld [vmem:[%s2] sm:$0x1]
    %v103 = vlaneseq
    %v104 = vshrl.u32 %v103, 7
    %v105 = vsub.s32 0, %v104
    %v106 = vrot.slane %v101, %v105
    %108 = vmatprep.subr.mxu0 0.0
    %109 = vmatpush1.msra.mxu0 %v85
    %110 = vmatprep.subr.mxu0 0.0
    %111 = vmatpush1.msra.mxu0 %v86
    %112 = vmatprep.subr.mxu0 0.0
    %113 = vmatpush1.msra.mxu0 %v87
    %114 = vmatprep.subr.mxu0 0.0
    %115 = vmatpush1.msra.mxu0 %v88
    %116 = vmatprep.subr.mxu0 0.0
    %117 = vmatpush1.msra.mxu0 %v89
    %118 = vmatprep.subr.mxu0 0.0
    %119 = vmatpush1.msra.mxu0 %v90
    %120 = vmatprep.subr.mxu0 0.0
    %121 = vmatpush1.msra.mxu0 %v91
    %122 = vmatprep.subr.mxu0 0.0
    %123 = vmatpush1.msra.mxu0 %v92
    %124 = vmatprep.subr.mxu0 0.0
    %125 = vmatpush1.msra.mxu0 %v93
    %126 = vmatprep.subr.mxu0 0.0
    %127 = vmatpush1.msra.mxu0 %v94
    %128 = vmatprep.subr.mxu0 0.0
    %129 = vmatpush1.msra.mxu0 %v95
    %130 = vmatprep.subr.mxu0 0.0
    %131 = vmatpush1.msra.mxu0 %v96
    %132 = vmatprep.subr.mxu0 0.0
    %133 = vmatpush1.msra.mxu0 %v97
    %134 = vmatprep.subr.mxu0 0.0
    %135 = vmatpush1.msra.mxu0 %v98
    %136 = vmatprep.subr.mxu0 0.0
    %137 = vmatpush1.msra.mxu0 %v99
    %138 = vmatprep.subr.mxu0 0.0
    %139 = vmatpush1.msra.mxu0 %v100
    %140 = vmatprep.subr.mxu0 0.0
    %141 = vmatpush1.msra.mxu0 0.0
    %142 = vmatprep.subr.mxu0 0.0
    %143 = vmatpush1.msra.mxu0 0.0
    %144 = vmatprep.subr.mxu0 0.0
    %145 = vmatpush1.msra.mxu0 0.0
    %146 = vmatprep.subr.mxu0 0.0
    %147 = vmatpush1.msra.mxu0 0.0
    %148 = vmatprep.subr.mxu0 0.0
    %149 = vmatpush1.msra.mxu0 0.0
    %150 = vmatprep.subr.mxu0 0.0
    %151 = vmatpush1.msra.mxu0 0.0
    %152 = vmatprep.subr.mxu0 0.0
    %153 = vmatpush1.msra.mxu0 0.0
    %154 = vmatprep.subr.mxu0 0.0
    %155 = vmatpush1.msra.mxu0 0.0
    %156 = vmatprep.subr.mxu0 0.0
    %157 = vmatpush1.msra.mxu0 0.0
    %158 = vmatprep.subr.mxu0 0.0
    %159 = vmatpush1.msra.mxu0 0.0
    %160 = vmatprep.subr.mxu0 0.0
    %161 = vmatpush1.msra.mxu0 0.0
    %162 = vmatprep.subr.mxu0 0.0
    %163 = vmatpush1.msra.mxu0 0.0
    %164 = vmatprep.subr.mxu0 0.0
    %165 = vmatpush1.msra.mxu0 0.0
    %166 = vmatprep.subr.mxu0 0.0
    %167 = vmatpush1.msra.mxu0 0.0
    %168 = vmatprep.subr.mxu0 0.0
    %169 = vmatpush1.msra.mxu0 0.0
    %170 = vmatprep.subr.mxu0 0.0
    %171 = vmatpush1.msra.mxu0 0.0
    %172 = vmatprep.mubr.f32.mxu0 0.0
    %173 = vmatmul.mubr.f32.gmra.mrb[0].mxu0 %v84
    %v174 = vpop.f32.mrb[0].mxu0
    %v175 = vadd.f32 %v106, %v174
    %v176 = vpop.f32.mrb[0].mxu0
    %177 = vdwg.mxu0
    %v178 = vmul.f32 %v175, 0.5
    %v179 = vmul.f32 %v175, 0.70710677
    %v180 = verf.f32.pop %v179
    %v181 = vadd.f32 %v180, 1.0
    %v182 = vmul.f32 %v178, %v181
    %v183 = vld [vmem:[#allocation7] sm:$0xff]
    %v184 = vld [vmem:[#allocation7 + $0x8] sm:$0xff]
    %v185 = vld [vmem:[#allocation7 + $0x10] sm:$0xff]
    %v186 = vld [vmem:[#allocation7 + $0x18] sm:$0xff]
    %v187 = vld [vmem:[#allocation7 + $0x20] sm:$0xff]
    %v188 = vld [vmem:[#allocation7 + $0x28] sm:$0xff]
    %v189 = vld [vmem:[#allocation7 + $0x30] sm:$0xff]
    %v190 = vld [vmem:[#allocation7 + $0x38] sm:$0xff]
    %v191 = vld [vmem:[#allocation7 + $0x40] sm:$0xff]
    %v192 = vld [vmem:[#allocation7 + $0x48] sm:$0xff]
    %v193 = vld [vmem:[#allocation7 + $0x50] sm:$0xff]
    %v194 = vld [vmem:[#allocation7 + $0x58] sm:$0xff]
    %v195 = vld [vmem:[#allocation7 + $0x60] sm:$0xff]
    %v196 = vld [vmem:[#allocation7 + $0x68] sm:$0xff]
    %v197 = vld [vmem:[#allocation7 + $0x70] sm:$0xff]
    %v198 = vld [vmem:[#allocation7 + $0x78] sm:$0xff]
    %v199 = vld [vmem:[%s4] sm:$0x1]
    %v201 = vlaneseq
    %v202 = vshrl.u32 %v201, 7
    %v203 = vsub.s32 0, %v202
    %v204 = vrot.slane %v199, %v203
    %206 = vmatprep.subr.mxu0 0.0
    %207 = vmatpush1.msra.mxu0 %v183
    %208 = vmatprep.subr.mxu0 0.0
    %209 = vmatpush1.msra.mxu0 %v184
    %210 = vmatprep.subr.mxu0 0.0
    %211 = vmatpush1.msra.mxu0 %v185
    %212 = vmatprep.subr.mxu0 0.0
    %213 = vmatpush1.msra.mxu0 %v186
    %214 = vmatprep.subr.mxu0 0.0
    %215 = vmatpush1.msra.mxu0 %v187
    %216 = vmatprep.subr.mxu0 0.0
    %217 = vmatpush1.msra.mxu0 %v188
    %218 = vmatprep.subr.mxu0 0.0
    %219 = vmatpush1.msra.mxu0 %v189
    %220 = vmatprep.subr.mxu0 0.0
    %221 = vmatpush1.msra.mxu0 %v190
    %222 = vmatprep.subr.mxu0 0.0
    %223 = vmatpush1.msra.mxu0 %v191
    %224 = vmatprep.subr.mxu0 0.0
    %225 = vmatpush1.msra.mxu0 %v192
    %226 = vmatprep.subr.mxu0 0.0
    %227 = vmatpush1.msra.mxu0 %v193
    %228 = vmatprep.subr.mxu0 0.0
    %229 = vmatpush1.msra.mxu0 %v194
    %230 = vmatprep.subr.mxu0 0.0
    %231 = vmatpush1.msra.mxu0 %v195
    %232 = vmatprep.subr.mxu0 0.0
    %233 = vmatpush1.msra.mxu0 %v196
    %234 = vmatprep.subr.mxu0 0.0
    %235 = vmatpush1.msra.mxu0 %v197
    %236 = vmatprep.subr.mxu0 0.0
    %237 = vmatpush1.msra.mxu0 %v198
    %238 = vmatprep.subr.mxu0 0.0
    %239 = vmatpush1.msra.mxu0 0.0
    %240 = vmatprep.subr.mxu0 0.0
    %241 = vmatpush1.msra.mxu0 0.0
    %242 = vmatprep.subr.mxu0 0.0
    %243 = vmatpush1.msra.mxu0 0.0
    %244 = vmatprep.subr.mxu0 0.0
    %245 = vmatpush1.msra.mxu0 0.0
    %246 = vmatprep.subr.mxu0 0.0
    %247 = vmatpush1.msra.mxu0 0.0
    %248 = vmatprep.subr.mxu0 0.0
    %249 = vmatpush1.msra.mxu0 0.0
    %250 = vmatprep.subr.mxu0 0.0
    %251 = vmatpush1.msra.mxu0 0.0
    %252 = vmatprep.subr.mxu0 0.0
    %253 = vmatpush1.msra.mxu0 0.0
    %254 = vmatprep.subr.mxu0 0.0
    %255 = vmatpush1.msra.mxu0 0.0
    %256 = vmatprep.subr.mxu0 0.0
    %257 = vmatpush1.msra.mxu0 0.0
    %258 = vmatprep.subr.mxu0 0.0
    %259 = vmatpush1.msra.mxu0 0.0
    %260 = vmatprep.subr.mxu0 0.0
    %261 = vmatpush1.msra.mxu0 0.0
    %262 = vmatprep.subr.mxu0 0.0
    %263 = vmatpush1.msra.mxu0 0.0
    %264 = vmatprep.subr.mxu0 0.0
    %265 = vmatpush1.msra.mxu0 0.0
    %266 = vmatprep.subr.mxu0 0.0
    %267 = vmatpush1.msra.mxu0 0.0
    %268 = vmatprep.subr.mxu0 0.0
    %269 = vmatpush1.msra.mxu0 0.0
    %270 = vmatprep.mubr.f32.mxu0 0.0
    %271 = vmatmul.mubr.f32.gmra.mrb[0].mxu0 %v182
    %v272 = vpop.f32.mrb[0].mxu0
    %v273 = vadd.f32 %v204, %v272
    %v274 = vpop.f32.mrb[0].mxu0
    %275 = vdwg.mxu0
    %v276 = vmul.f32 %v273, 0.5
    %v277 = vmul.f32 %v273, 0.70710677
    %v278 = verf.f32.pop %v277
    %v279 = vadd.f32 %v278, 1.0
    %v280 = vmul.f32 %v276, %v279
    %v281 = vld [vmem:[#allocation8] sm:$0xff]
    %v282 = vld [vmem:[#allocation8 + $0x8] sm:$0xff]
    %v283 = vld [vmem:[#allocation8 + $0x10] sm:$0xff]
    %v284 = vld [vmem:[#allocation8 + $0x18] sm:$0xff]
    %v285 = vld [vmem:[#allocation8 + $0x20] sm:$0xff]
    %v286 = vld [vmem:[#allocation8 + $0x28] sm:$0xff]
    %v287 = vld [vmem:[#allocation8 + $0x30] sm:$0xff]
    %v288 = vld [vmem:[#allocation8 + $0x38] sm:$0xff]
    %v289 = vld [vmem:[#allocation8 + $0x40] sm:$0xff]
    %v290 = vld [vmem:[#allocation8 + $0x48] sm:$0xff]
    %v291 = vld [vmem:[#allocation8 + $0x50] sm:$0xff]
    %v292 = vld [vmem:[#allocation8 + $0x58] sm:$0xff]
    %v293 = vld [vmem:[#allocation8 + $0x60] sm:$0xff]
    %v294 = vld [vmem:[#allocation8 + $0x68] sm:$0xff]
    %v295 = vld [vmem:[#allocation8 + $0x70] sm:$0xff]
    %v296 = vld [vmem:[#allocation8 + $0x78] sm:$0xff]
    %v297 = vld [vmem:[%s6] sm:$0x1]
    %v299 = vlaneseq
    %v300 = vshrl.u32 %v299, 7
    %v301 = vsub.s32 0, %v300
    %v302 = vrot.slane %v297, %v301
    %304 = vmatprep.subr.mxu0 0.0
    %305 = vmatpush1.msra.mxu0 %v281
    %306 = vmatprep.subr.mxu0 0.0
    %307 = vmatpush1.msra.mxu0 %v282
    %308 = vmatprep.subr.mxu0 0.0
    %309 = vmatpush1.msra.mxu0 %v283
    %310 = vmatprep.subr.mxu0 0.0
    %311 = vmatpush1.msra.mxu0 %v284
    %312 = vmatprep.subr.mxu0 0.0
    %313 = vmatpush1.msra.mxu0 %v285
    %314 = vmatprep.subr.mxu0 0.0
    %315 = vmatpush1.msra.mxu0 %v286
    %316 = vmatprep.subr.mxu0 0.0
    %317 = vmatpush1.msra.mxu0 %v287
    %318 = vmatprep.subr.mxu0 0.0
    %319 = vmatpush1.msra.mxu0 %v288
    %320 = vmatprep.subr.mxu0 0.0
    %321 = vmatpush1.msra.mxu0 %v289
    %322 = vmatprep.subr.mxu0 0.0
    %323 = vmatpush1.msra.mxu0 %v290
    %324 = vmatprep.subr.mxu0 0.0
    %325 = vmatpush1.msra.mxu0 %v291
    %326 = vmatprep.subr.mxu0 0.0
    %327 = vmatpush1.msra.mxu0 %v292
    %328 = vmatprep.subr.mxu0 0.0
    %329 = vmatpush1.msra.mxu0 %v293
    %330 = vmatprep.subr.mxu0 0.0
    %331 = vmatpush1.msra.mxu0 %v294
    %332 = vmatprep.subr.mxu0 0.0
    %333 = vmatpush1.msra.mxu0 %v295
    %334 = vmatprep.subr.mxu0 0.0
    %335 = vmatpush1.msra.mxu0 %v296
    %336 = vmatprep.subr.mxu0 0.0
    %337 = vmatpush1.msra.mxu0 0.0
    %338 = vmatprep.subr.mxu0 0.0
    %339 = vmatpush1.msra.mxu0 0.0
    %340 = vmatprep.subr.mxu0 0.0
    %341 = vmatpush1.msra.mxu0 0.0
    %342 = vmatprep.subr.mxu0 0.0
    %343 = vmatpush1.msra.mxu0 0.0
    %344 = vmatprep.subr.mxu0 0.0
    %345 = vmatpush1.msra.mxu0 0.0
    %346 = vmatprep.subr.mxu0 0.0
    %347 = vmatpush1.msra.mxu0 0.0
    %348 = vmatprep.subr.mxu0 0.0
    %349 = vmatpush1.msra.mxu0 0.0
    %350 = vmatprep.subr.mxu0 0.0
    %351 = vmatpush1.msra.mxu0 0.0
    %352 = vmatprep.subr.mxu0 0.0
    %353 = vmatpush1.msra.mxu0 0.0
    %354 = vmatprep.subr.mxu0 0.0
    %355 = vmatpush1.msra.mxu0 0.0
    %356 = vmatprep.subr.mxu0 0.0
    %357 = vmatpush1.msra.mxu0 0.0
    %358 = vmatprep.subr.mxu0 0.0
    %359 = vmatpush1.msra.mxu0 0.0
    %360 = vmatprep.subr.mxu0 0.0
    %361 = vmatpush1.msra.mxu0 0.0
    %362 = vmatprep.subr.mxu0 0.0
    %363 = vmatpush1.msra.mxu0 0.0
    %364 = vmatprep.subr.mxu0 0.0
    %365 = vmatpush1.msra.mxu0 0.0
    %366 = vmatprep.subr.mxu0 0.0
    %367 = vmatpush1.msra.mxu0 0.0
    %368 = vmatprep.mubr.f32.mxu0 0.0
    %369 = vmatmul.mubr.f32.gmra.mrb[0].mxu0 %v280
    %v370 = vpop.f32.mrb[0].mxu0
    %v371 = vadd.f32 %v302, %v370
    %v372 = vpop.f32.mrb[0].mxu0
    %373 = vdwg.mxu0
    %374 = vst [vmem:[#allocation10] sm:$0xff] %v371
    %375 = vst [vmem:[#allocation11] sm:$0xff] %v280
    %376 = vst [vmem:[#allocation13] sm:$0xff] %v273
    // Predicated region
    $region46: #{tpu_custom_call.1} parent=1 // pred_check
      _
    $region47: #{tpu_custom_call.1} parent=1 // pred_check_branch
      %378 = sbr.rel (0) target = $region49
    $region48: #{tpu_custom_call.1} parent=1 // pred_region
      %s380 = ssub.s32 128, 128
      %381 = vsyncadd [#allocation4], %s380
      %s383 = sshll.u32 [#allocation10], 4
      %s384 = int_to_ptr.vmem [resolvable:$true] %s383
      %386 = dma.vmem_to_hbm [thread:$0]  %s384, 128, %s7, [#allocation4]
    $region49: #{tpu_custom_call.1} parent=1 // pred_fallthru
      _
    // Predicated region
    $region50: #{tpu_custom_call.1} parent=1 // pred_check
      _
    $region51: #{tpu_custom_call.1} parent=1 // pred_check_branch
      %388 = sbr.rel (0) target = $region53
    $region52: #{tpu_custom_call.1} parent=1 // pred_region
      %s390 = ssub.s32 128, 128
      %391 = vsyncadd [#allocation12], %s390
      %s393 = sshll.u32 [#allocation11], 4
      %s394 = int_to_ptr.vmem [resolvable:$true] %s393
      %396 = dma.vmem_to_hbm [thread:$0]  %s394, 128, %s8, [#allocation12]
    $region53: #{tpu_custom_call.1} parent=1 // pred_fallthru
      _
    // Predicated region
    $region54: #{tpu_custom_call.1} parent=1 // pred_check
      _
    $region55: #{tpu_custom_call.1} parent=1 // pred_check_branch
      %398 = sbr.rel (0) target = $region57
    $region56: #{tpu_custom_call.1} parent=1 // pred_region
      %s400 = ssub.s32 128, 128
      %401 = vsyncadd [#allocation12], %s400
      %s403 = sshll.u32 [#allocation13], 4
      %s404 = int_to_ptr.vmem [resolvable:$true] %s403
      %406 = dma.vmem_to_hbm [thread:$0]  %s404, 128, %s9, [#allocation12]
    $region57: #{tpu_custom_call.1} parent=1 // pred_fallthru
      _
    // Predicated region
    $region58: #{tpu_custom_call.1} parent=1 // pred_check
      _
    $region59: #{tpu_custom_call.1} parent=1 // pred_check_branch
      %408 = sbr.rel (0) target = $region61
    $region60: #{tpu_custom_call.1} parent=1 // pred_region
      %409 = dma.done [#allocation4], 128
    $region61: #{tpu_custom_call.1} parent=1 // pred_fallthru
      _
    // Predicated region
    $region62: #{tpu_custom_call.1} parent=1 // pred_check
      _
    $region63: #{tpu_custom_call.1} parent=1 // pred_check_branch
      %411 = sbr.rel (0) target = $region65
    $region64: #{tpu_custom_call.1} parent=1 // pred_region
      %412 = dma.done [#allocation12], 128
    $region65: #{tpu_custom_call.1} parent=1 // pred_fallthru
      _
    // Predicated region
    $region66: #{tpu_custom_call.1} parent=1 // pred_check
      _
    $region67: #{tpu_custom_call.1} parent=1 // pred_check_branch
      %414 = sbr.rel (0) target = $region69
    $region68: #{tpu_custom_call.1} parent=1 // pred_region
      %415 = dma.done [#allocation12], 128
    $region69: #{tpu_custom_call.1} parent=1 // pred_fallthru
      _
    %416 = vsyncpa [#allocation3], 1
    %417 = vsyncpa [#allocation6], 1
    %418 = vsyncpa [#allocation9], 1
    %419 = vsyncpa [#allocation4], 1
    %420 = vsyncpa [#allocation12], 1

</llo_original>
